<compile_context>
chip_gen: v5e
topology: v5e:2x2
jax: 0.10.0
libtpu: 0.0.40
codegen_flags: <defaults>
</compile_context>

<pallas_src>
import functools

import jax
import jax.numpy as jnp
from jax.experimental import pallas as pl
from jax.experimental.pallas import tpu as pltpu


# ----------------------------------------------------------------------------
# The `Functional` container, mirroring the PyTorch module's semantics.
# ----------------------------------------------------------------------------
class Functional:
    """Stores *args / **kwargs and applies `func(*inputs, *args, **kwargs)`."""

    def __init__(self, func, *args, **kwargs):
        l_args_keys = []
        for i in range(len(args)):
            k = "argv" + str(i)
            setattr(self, k, args[i])
            l_args_keys.append(k)
        l_kwargs_keys = []
        for k, v in kwargs.items():
            setattr(self, k, v)
            l_kwargs_keys.append(k)
        self.args_keys = l_args_keys
        self.kwargs_keys = l_kwargs_keys
        self._func_ = func

    def __call__(self, *inputs):
        args = [getattr(self, k) for k in self.args_keys]
        kwargs = {k: getattr(self, k) for k in self.kwargs_keys}
        return self._func_(*inputs, *args, **kwargs)


# ----------------------------------------------------------------------------
# Helpers
# ----------------------------------------------------------------------------
def _round_up(x, m):
    return ((x + m - 1) // m) * m


def _maybe_pad2d(a, rows, cols):
    r, c = a.shape
    if r == rows and c == cols:
        return a
    return jnp.pad(a, ((0, rows - r), (0, cols - c)))


# ----------------------------------------------------------------------------
# Kernel A: single-K-tile fused linear (+ optional ReLU).  2-D grid (i, j).
#   x_ref: (tm, Kp)   w_ref: (Kp, tn)   b_ref: (1, tn)   o_ref: (tm, tn)
# ----------------------------------------------------------------------------
def _linear_kernel_fused(x_ref, w_ref, b_ref, o_ref, *, apply_relu):
    out = jnp.dot(x_ref[...], w_ref[...], preferred_element_type=jnp.float32)
    out = out + b_ref[...]
    if apply_relu:
        out = jnp.maximum(out, 0.0)
    o_ref[...] = out.astype(o_ref.dtype)


# ----------------------------------------------------------------------------
# Kernel B: K-tiled linear (+ optional ReLU).  3-D grid (i, j, k) with the
# reduction axis last; f32 accumulator scratch resident across K steps.
#   x_ref: (tm, tk)   w_ref: (tk, tn)   b_ref: (1, tn)
#   o_ref: (tm, tn)   acc_ref: (tm, tn) f32 scratch
# ----------------------------------------------------------------------------
def _linear_kernel_acc(x_ref, w_ref, b_ref, o_ref, acc_ref, *, apply_relu):
    k = pl.program_id(2)

    @pl.when(k == 0)
    def _():
        acc_ref[...] = jnp.zeros_like(acc_ref)

    # Weight is already (K, N): straight MXU push, f32 accumulation.
    acc_ref[...] += jnp.dot(
        x_ref[...], w_ref[...], preferred_element_type=jnp.float32
    )

    @pl.when(k == pl.num_programs(2) - 1)
    def _():
        # Epilogue in f32 on the accumulator (safe on v5e: no bf16 VALU), then
        # a single cast on store.  Bias add / ReLU are VPU filler under the
        # final MXU drain.
        out = acc_ref[...] + b_ref[...]
        if apply_relu:
            out = jnp.maximum(out, 0.0)
        o_ref[...] = out.astype(o_ref.dtype)


def pallas_linear(x, weight, bias, activation=None, *, tm=256, tn=512, tk=512):
    """y = x @ weight.T + bias, computed in a tiled Pallas TPU kernel.

    x:      (..., K)  -- leading dims are flattened into M
    weight: (N, K)    (PyTorch nn.functional.linear convention)
    bias:   (N,)
    """
    orig_shape = x.shape
    K = orig_shape[-1]
    x2d = x.reshape(-1, K)
    M = x2d.shape[0]
    N, K2 = weight.shape
    assert K == K2, f"contraction mismatch: x has K={K}, weight has K={K2}"
    apply_relu = activation == "relu"
    out_dtype = x.dtype

    # ------------------------------------------------------------------
    # Layout prep (outside the kernel, once per call):
    #   * pre-transpose the stored weight to (K, N),
    #   * pad K and N up to multiples of 128 (lane-dense loads & stores) and
    #     M up to a multiple of 8 (sublane granule).  Zero padding is exact
    #     for a matmul; padded output rows/cols are sliced away below.
    # ------------------------------------------------------------------
    tm_eff = min(tm, _round_up(M, 8))
    tn_eff = min(tn, _round_up(N, 128))
    tk_eff = min(tk, _round_up(K, 128))

    Mp = _round_up(M, tm_eff)
    Np = _round_up(N, tn_eff)
    Kp = _round_up(K, tk_eff)

    x_p = _maybe_pad2d(x2d, Mp, Kp)                                   # (Mp, Kp)
    w_kn = _maybe_pad2d(weight.T, Kp, Np)                             # (Kp, Np)
    b2d = _maybe_pad2d(bias.reshape(1, N), 1, Np)                     # (1,  Np)

    n_k_steps = Kp // tk_eff
    cost = pl.CostEstimate(
        flops=2 * Mp * Np * Kp,
        transcendentals=0,
        bytes_accessed=(Mp * Kp + Kp * Np + Mp * Np) * x.dtype.itemsize,
    )

    if n_k_steps == 1:
        # Fast path: whole contraction in one MXU pass, no scratch accumulator,
        # 2-D grid, both axes parallel (megacore-shardable).
        out_padded = pl.pallas_call(
            functools.partial(_linear_kernel_fused, apply_relu=apply_relu),
            out_shape=jax.ShapeDtypeStruct((Mp, Np), out_dtype),
            grid=(Mp // tm_eff, Np // tn_eff),
            in_specs=[
                pl.BlockSpec((tm_eff, Kp), lambda i, j: (i, 0)),      # x
                pl.BlockSpec((Kp, tn_eff), lambda i, j: (0, j)),      # W^T
                pl.BlockSpec((1, tn_eff), lambda i, j: (0, j)),       # bias
            ],
            out_specs=pl.BlockSpec((tm_eff, tn_eff), lambda i, j: (i, j)),
            compiler_params=pltpu.CompilerParams(
                dimension_semantics=("parallel", "parallel"),
            ),
            cost_estimate=cost,
        )(x_p, w_kn, b2d)
    else:
        # General path: K tiled, reduction axis last in the grid, f32 VMEM
        # accumulator resident across K steps.
        out_padded = pl.pallas_call(
            functools.partial(_linear_kernel_acc, apply_relu=apply_relu),
            out_shape=jax.ShapeDtypeStruct((Mp, Np), out_dtype),
            grid=(Mp // tm_eff, Np // tn_eff, n_k_steps),
            in_specs=[
                pl.BlockSpec((tm_eff, tk_eff), lambda i, j, k: (i, k)),   # x
                pl.BlockSpec((tk_eff, tn_eff), lambda i, j, k: (k, j)),   # W^T
                pl.BlockSpec((1, tn_eff), lambda i, j, k: (0, j)),        # bias
            ],
            out_specs=pl.BlockSpec((tm_eff, tn_eff), lambda i, j, k: (i, j)),
            scratch_shapes=[pltpu.VMEM((tm_eff, tn_eff), jnp.float32)],
            compiler_params=pltpu.CompilerParams(
                dimension_semantics=("parallel", "parallel", "arbitrary"),
            ),
            cost_estimate=cost,
        )(x_p, w_kn, b2d)

    out = out_padded[:M, :N]
    return out.reshape(*orig_shape[:-1], N)


# ----------------------------------------------------------------------------
# Demo / self-test
# ----------------------------------------------------------------------------
if __name__ == "__main__":
    # Small shapes implied by the forward: batch=2, seq=8, hidden=32, out=32.
    batch, seq, hidden, out_features = 2, 8, 32, 32

    key = jax.random.PRNGKey(0)
    kx, kw, kb = jax.random.split(key, 3)
    x = jax.random.normal(kx, (batch, seq, hidden), dtype=jnp.float32)
    weight = jax.random.normal(kw, (out_features, hidden), dtype=jnp.float32) * 0.1
    bias = jax.random.normal(kb, (out_features,), dtype=jnp.float32) * 0.1

    # Functional(func, *args, **kwargs): args = (weight, bias), kwarg = activation.
    mod = Functional(pallas_linear, weight, bias, activation="relu")

    y = mod(x)
    y = jax.block_until_ready(y)

    # Reference check in plain JAX.
    y_ref = jnp.maximum(jnp.einsum("bsk,nk->bsn", x, weight) + bias, 0.0)
    assert y.shape == (batch, seq, out_features)
    assert jnp.allclose(y, y_ref, atol=1e-5, rtol=1e-5)

    print("KERNEL_OK")
</pallas_src>

<mosaic_0001>
module attributes {stable_mosaic.version = 11 : i64} {
  func.func @_linear_kernel_fused(%arg0: i32, %arg1: i32, %arg2: memref<16x128xf32, #tpu.memory_space<vmem>>, %arg3: memref<128x128xf32, #tpu.memory_space<vmem>>, %arg4: memref<1x128xf32, #tpu.memory_space<vmem>>, %arg5: memref<16x128xf32, #tpu.memory_space<vmem>>) attributes {dimension_semantics = [#tpu.dimension_semantics<parallel>, #tpu.dimension_semantics<parallel>], iteration_bounds = array<i64: 1, 1>, scalar_prefetch = 0 : i64, scratch_operands = 0 : i64, tpu.core_type = #tpu.core_type<tc>, window_params = [{transform_indices = @transform_0, window_bounds = array<i64: 16, 128>}, {transform_indices = @transform_1, window_bounds = array<i64: 128, 128>}, {transform_indices = @transform_2, window_bounds = array<i64: 1, 128>}, {transform_indices = @transform_3, window_bounds = array<i64: 16, 128>}]} {
    %c0 = arith.constant 0 : index
    %c0_0 = arith.constant 0 : index
    %0 = vector.load %arg2[%c0, %c0_0] : memref<16x128xf32, #tpu.memory_space<vmem>>, vector<16x128xf32>
    %c0_1 = arith.constant 0 : index
    %c0_2 = arith.constant 0 : index
    %1 = vector.load %arg3[%c0_1, %c0_2] : memref<128x128xf32, #tpu.memory_space<vmem>>, vector<128x128xf32>
    %cst = arith.constant dense<0.000000e+00> : vector<16x128xf32>
    %2 = tpu.matmul %0, %1, %cst {dimension_numbers = #tpu.dot_dimension_numbers<[1], [0], [0], [1], [0, 0, 1, 1], [], []>} : vector<16x128xf32>, vector<128x128xf32>, vector<16x128xf32> -> vector<16x128xf32>
    %c0_3 = arith.constant 0 : index
    %c0_4 = arith.constant 0 : index
    %3 = vector.load %arg4[%c0_3, %c0_4] : memref<1x128xf32, #tpu.memory_space<vmem>>, vector<1x128xf32>
    %4 = vector.broadcast %3 : vector<1x128xf32> to vector<16x128xf32>
    %5 = arith.addf %2, %4 : vector<16x128xf32>
    %cst_5 = arith.constant 0.000000e+00 : f32
    %6 = vector.broadcast %cst_5 : f32 to vector<16x128xf32>
    %7 = arith.maximumf %5, %6 : vector<16x128xf32>
    %c0_6 = arith.constant 0 : index
    %c0_7 = arith.constant 0 : index
    %8 = vector.load %arg5[%c0_6, %c0_7] : memref<16x128xf32, #tpu.memory_space<vmem>>, vector<16x128xf32>
    tpu.vector_store %arg5[%c0_6, %c0_7], %7 {strides = array<i32>} : memref<16x128xf32, #tpu.memory_space<vmem>>, vector<16x128xf32>,
    return
  }
  func.func @transform_0(%arg0: i32, %arg1: i32) -> (i32, i32) {
    %c0_i32 = arith.constant 0 : i32
    %c0_i32_0 = arith.constant 0 : i32
    return %arg0, %c0_i32 : i32, i32
  }
  func.func @transform_1(%arg0: i32, %arg1: i32) -> (i32, i32) {
    %c0_i32 = arith.constant 0 : i32
    %c0_i32_0 = arith.constant 0 : i32
    return %c0_i32, %arg1 : i32, i32
  }
  func.func @transform_2(%arg0: i32, %arg1: i32) -> (i32, i32) {
    %c0_i32 = arith.constant 0 : i32
    %c0_i32_0 = arith.constant 0 : i32
    return %c0_i32, %arg1 : i32, i32
  }
  func.func @transform_3(%arg0: i32, %arg1: i32) -> (i32, i32) {
    %c0_i32 = arith.constant 0 : i32
    return %arg0, %arg1 : i32, i32
  }
}

</mosaic_0001>

<llo_original>
// kernel: tpu_custom_call.1
$region0: #{tpu_custom_call.1}
  #allocation0 [shape = 'u32[]', space=smem, size = 0x4, offset = 0x4, fixed_abs, tag = 'smem constant byte address 0x4 - core index']
  #allocation1 [shape = 'u32[72,128]{1,0:T(1,128)}', space=vmem, size = 0x9000, scoped, tag = 'internal scratch']
  %s0 = inlined_call_operand.hbm [shape: f32[16,128], index: 0, kind: input, shape index: {}]
  %s1 = inlined_call_operand.hbm [shape: f32[128,128], index: 1, kind: input, shape index: {}]
  %s2 = inlined_call_operand.vmem [shape: f32[1,128], index: 2, kind: input, shape index: {}]
  %s3 = inlined_call_operand.hbm [shape: f32[16,128], index: 3, kind: output, shape index: {}]
  %s4 = sld [smem:[#allocation0]]
  $region30: #{tpu_custom_call.1} parent=0
    _
  %s6 = ssub.s32 1, %s4
  %s7 = scalar_select 0, %s6, %s4
  $region1: #{tpu_custom_call.1} parent=0
    #allocation2 [shape = 'u8[8192]{0}', space=vmem, size = 0x2000, scoped, tag = 'input window, operand 0, single buffered']
    #allocation3 [shape = 's32[1]{0}', space=sflag, size = 0x4, scoped, tag = 'scoped memory for tpu_custom_call.1']
    #allocation4 [shape = 's32[1]{0}', space=sflag, size = 0x4, scoped, tag = 'scoped memory for tpu_custom_call.1']
    #allocation5 [shape = 'u8[65536]{0}', space=vmem, size = 0x10000, scoped, tag = 'input window, operand 1, single buffered']
    #allocation6 [shape = 's32[1]{0}', space=sflag, size = 0x4, scoped, tag = 'scoped memory for tpu_custom_call.1']
    #allocation7 [shape = 'u8[8192]{0}', space=vmem, size = 0x2000, scoped, tag = 'output window, operand 0, single buffered']
    %8 = vsyncpa [#allocation3], 0
    %9 = vsyncpa [#allocation6], 0
    %10 = vsyncpa [#allocation4], 0
    // Predicated region
    $region2: #{tpu_custom_call.1} parent=1 // pred_check
      _
    $region3: #{tpu_custom_call.1} parent=1 // pred_check_branch
      %12 = sbr.rel (0) target = $region5
    $region4: #{tpu_custom_call.1} parent=1 // pred_region
      %14 = vsyncadd [#allocation3], 0
      %s15 = sshll.u32 %s0, 4
      %s16 = int_to_ptr.hbm [resolvable:$true] %s15
      %s17 = sshll.u32 [#allocation2], 4
      %s18 = int_to_ptr.vmem [resolvable:$true] %s17
      %23 = dma.hbm_to_vmem [thread:$0]  %s16, 256, %s18, [#allocation3], 128, 128, 8
    $region5: #{tpu_custom_call.1} parent=1 // pred_fallthru
      _
    // Predicated region
    $region6: #{tpu_custom_call.1} parent=1 // pred_check
      _
    $region7: #{tpu_custom_call.1} parent=1 // pred_check_branch
      %25 = sbr.rel (0) target = $region9
    $region8: #{tpu_custom_call.1} parent=1 // pred_region
      %27 = vsyncadd [#allocation6], 0
      %s28 = sshll.u32 %s1, 4
      %s29 = int_to_ptr.hbm [resolvable:$true] %s28
      %s30 = sshll.u32 [#allocation5], 4
      %s31 = int_to_ptr.vmem [resolvable:$true] %s30
      %36 = dma.hbm_to_vmem [thread:$0]  %s29, 2048, %s31, [#allocation6], 128, 128, 8
    $region9: #{tpu_custom_call.1} parent=1 // pred_fallthru
      _
    // Predicated region
    $region10: #{tpu_custom_call.1} parent=1 // pred_check
      _
    $region11: #{tpu_custom_call.1} parent=1 // pred_check_branch
      %38 = sbr.rel (0) target = $region13
    $region12: #{tpu_custom_call.1} parent=1 // pred_region
      _
    $region13: #{tpu_custom_call.1} parent=1 // pred_fallthru
      _
    // Predicated region
    $region14: #{tpu_custom_call.1} parent=1 // pred_check
      _
    $region15: #{tpu_custom_call.1} parent=1 // pred_check_branch
      %40 = sbr.rel (0) target = $region17
    $region16: #{tpu_custom_call.1} parent=1 // pred_region
      %42 = dma.done [#allocation3], 256
    $region17: #{tpu_custom_call.1} parent=1 // pred_fallthru
      _
    // Predicated region
    $region18: #{tpu_custom_call.1} parent=1 // pred_check
      _
    $region19: #{tpu_custom_call.1} parent=1 // pred_check_branch
      %44 = sbr.rel (0) target = $region21
    $region20: #{tpu_custom_call.1} parent=1 // pred_region
      %46 = dma.done [#allocation6], 2048
    $region21: #{tpu_custom_call.1} parent=1 // pred_fallthru
      _
    %v47 = vld [vmem:[#allocation2] sm:$0xff]
    %v48 = vld [vmem:[#allocation2 + $0x8] sm:$0xff]
    %v49 = vld [vmem:[#allocation5] sm:$0xff]
    %v50 = vld [vmem:[#allocation5 + $0x8] sm:$0xff]
    %v51 = vld [vmem:[#allocation5 + $0x10] sm:$0xff]
    %v52 = vld [vmem:[#allocation5 + $0x18] sm:$0xff]
    %v53 = vld [vmem:[#allocation5 + $0x20] sm:$0xff]
    %v54 = vld [vmem:[#allocation5 + $0x28] sm:$0xff]
    %v55 = vld [vmem:[#allocation5 + $0x30] sm:$0xff]
    %v56 = vld [vmem:[#allocation5 + $0x38] sm:$0xff]
    %v57 = vld [vmem:[#allocation5 + $0x40] sm:$0xff]
    %v58 = vld [vmem:[#allocation5 + $0x48] sm:$0xff]
    %v59 = vld [vmem:[#allocation5 + $0x50] sm:$0xff]
    %v60 = vld [vmem:[#allocation5 + $0x58] sm:$0xff]
    %v61 = vld [vmem:[#allocation5 + $0x60] sm:$0xff]
    %v62 = vld [vmem:[#allocation5 + $0x68] sm:$0xff]
    %v63 = vld [vmem:[#allocation5 + $0x70] sm:$0xff]
    %v64 = vld [vmem:[#allocation5 + $0x78] sm:$0xff]
    %v65 = vld [vmem:[%s2] sm:$0x1]
    %v67 = vperm.slane %v65, 0
    %69 = vmatpush.msra.mxu0 %v64
    %70 = vmatpush.msra.mxu0 %v63
    %71 = vmatpush.msra.mxu0 %v62
    %72 = vmatpush.msra.mxu0 %v61
    %73 = vmatpush.msra.mxu0 %v60
    %74 = vmatpush.msra.mxu0 %v59
    %75 = vmatpush.msra.mxu0 %v58
    %76 = vmatpush.msra.mxu0 %v57
    %77 = vmatpush.msra.mxu0 %v56
    %78 = vmatpush.msra.mxu0 %v55
    %79 = vmatpush.msra.mxu0 %v54
    %80 = vmatpush.msra.mxu0 %v53
    %81 = vmatpush.msra.mxu0 %v52
    %82 = vmatpush.msra.mxu0 %v51
    %83 = vmatpush.msra.mxu0 %v50
    %84 = vmatpush.msra.mxu0 %v49
    %85 = vmatmul.f32.gmra.mxu0 %v47
    %v86 = vpop.f32.mrf.mxu0
    %v87 = vadd.f32 %v67, %v86
    %88 = vmatmul.f32.gmra.mxu0 %v48
    %v89 = vpop.f32.mrf.mxu0
    %v90 = vadd.f32 %v67, %v89
    %91 = vdwg.mxu0
    %v92 = vmax.f32 %v87, 0.0
    %v93 = vmax.f32 %v90, 0.0
    %94 = vst [vmem:[#allocation7] sm:$0xff] %v92
    %95 = vst [vmem:[#allocation7 + $0x8] sm:$0xff] %v93
    // Predicated region
    $region22: #{tpu_custom_call.1} parent=1 // pred_check
      _
    $region23: #{tpu_custom_call.1} parent=1 // pred_check_branch
      %97 = sbr.rel (0) target = $region25
    $region24: #{tpu_custom_call.1} parent=1 // pred_region
      %99 = vsyncadd [#allocation4], 0
      %s100 = sshll.u32 [#allocation7], 4
      %s101 = int_to_ptr.vmem [resolvable:$true] %s100
      %s102 = sshll.u32 %s3, 4
      %s103 = int_to_ptr.hbm [resolvable:$true] %s102
      %108 = dma.vmem_to_hbm [thread:$0]  %s101, 256, %s103, [#allocation4], 128, 128, 8
    $region25: #{tpu_custom_call.1} parent=1 // pred_fallthru
      _
    // Predicated region
    $region26: #{tpu_custom_call.1} parent=1 // pred_check
      _
    $region27: #{tpu_custom_call.1} parent=1 // pred_check_branch
      %110 = sbr.rel (0) target = $region29
    $region28: #{tpu_custom_call.1} parent=1 // pred_region
      %112 = dma.done [#allocation4], 256
    $region29: #{tpu_custom_call.1} parent=1 // pred_fallthru
      _
    %113 = vsyncpa [#allocation3], 1
    %114 = vsyncpa [#allocation6], 1
    %115 = vsyncpa [#allocation4], 1

</llo_original>
